<compile_context>
chip_gen: v7x
topology: tpu7x:2x2x1
jax: 0.10.0
libtpu: 0.0.40
codegen_flags: <defaults>
</compile_context>

<pallas_src>
import numpy as np
import jax
import jax.numpy as jnp
from jax.experimental import pallas as pl
from jax.experimental.pallas import tpu as pltpu


def _round_up(x, m):
    return ((x + m - 1) // m) * m


# ----------------------------- Pallas kernel --------------------------------
def _edge_mlp_kernel(x_ref, w1_ref, b1_ref, w2_ref, b2_ref, o_ref):
    # Single lane-dense MXU push for (virtual) concat([s, r*mask, e]) @ W1.
    h = jnp.dot(x_ref[...], w1_ref[...], preferred_element_type=jnp.float32)
    h = jnp.maximum(h + b1_ref[...], 0.0)            # bias + ReLU in f32 (VPU)
    h = h.astype(w2_ref.dtype)                       # bf16 MXU path when enabled
    o_ref[...] = (jnp.dot(h, w2_ref[...], preferred_element_type=jnp.float32)
                  + b2_ref[...]).astype(o_ref.dtype)


def edge_block_mlp(collected, w1, b1, w2, b2, *,
                   tile_e=512, compute_dtype=jnp.float32):
    """2-layer MLP over a pre-concatenated edge slab.

    collected: [E, Fin] = [senders_attr | receivers_attr*mask | edge_attr]
    Returns [E, Hout] float32.
    """
    E, Fin = collected.shape
    H = w1.shape[1]
    Hout = w2.shape[1]

    # Lane-dense layout: pad feature dims to multiples of 128.
    Fin_p = _round_up(Fin, 128)
    Hout_p = _round_up(Hout, 128)

    # Sublane-aligned edge tile; bf16 packs 16 rows per (pair of) sublanes.
    min_rows = 16 if compute_dtype == jnp.bfloat16 else 8
    tile_e = _round_up(max(min_rows, min(tile_e, _round_up(E, min_rows))),
                       min_rows)
    Ep = _round_up(E, tile_e)

    # Zero-pad rows/cols; padded W1 rows are zero so padded input lanes are inert.
    x = jnp.pad(collected, ((0, Ep - E), (0, Fin_p - Fin))).astype(compute_dtype)
    w1p = jnp.pad(w1, ((0, Fin_p - Fin), (0, 0))).astype(compute_dtype)
    w2p = jnp.pad(w2, ((0, 0), (0, Hout_p - Hout))).astype(compute_dtype)
    b1p = b1.reshape(1, H).astype(jnp.float32)
    b2p = jnp.pad(b2.reshape(1, Hout),
                  ((0, 0), (0, Hout_p - Hout))).astype(jnp.float32)

    edge_spec = lambda F: pl.BlockSpec((tile_e, F), lambda i: (i, 0))
    # Weights/biases: constant index_map -> fetched once, stay resident in VMEM.
    full_spec = lambda shp: pl.BlockSpec(shp, lambda i: (0, 0))

    out = pl.pallas_call(
        _edge_mlp_kernel,
        out_shape=jax.ShapeDtypeStruct((Ep, Hout_p), jnp.float32),
        grid_spec=pltpu.PrefetchScalarGridSpec(
            num_scalar_prefetch=0,
            grid=(Ep // tile_e,),
            in_specs=[edge_spec(Fin_p),
                      full_spec((Fin_p, H)), full_spec((1, H)),
                      full_spec((H, Hout_p)), full_spec((1, Hout_p))],
            out_specs=edge_spec(Hout_p),
        ),
        compiler_params=pltpu.CompilerParams(
            dimension_semantics=("parallel",),      # shard steps across TCs (v7x)
            vmem_limit_bytes=32 << 20),             # headroom for large tiles on v5e
    )(x, w1p, b1p, w2p, b2p)

    return out[:E, :Hout]


# ------------------------------ JAX glue -------------------------------------
def edge_block_forward(node_attr, edge_index_node, edge_attr,
                       cells_node, cells_index, num_cells,
                       cell_edge_index, params, *,
                       tile_e=512, compute_dtype=jnp.float32):
    """Mirrors EdgeBlock.forward (returns the Data fields as a dict)."""
    w1, b1, w2, b2 = params

    # calc_cell_centered_with_node_attr(..., reduce='sum', map=True):
    # gather node features at cell corners, scatter-sum to cells.
    gathered = node_attr[cells_node]                              # [K, Cc]
    cell_attr = jax.ops.segment_sum(gathered, cells_index,
                                    num_segments=num_cells)       # [num_cells, Cc]

    senders, receivers = cell_edge_index
    mask = (senders != receivers).astype(node_attr.dtype)[:, None]  # [E, 1]
    senders_attr = cell_attr[senders]                             # [E, Cc]
    receivers_attr = cell_attr[receivers] * mask                  # mask folded here
    # One pre-concatenated slab -> single DMA stream + one MXU dot per tile.
    collected = jnp.concatenate([senders_attr, receivers_attr, edge_attr],
                                axis=1)                           # [E, 2Cc+Ce]

    edge_attr_new = edge_block_mlp(collected, w1, b1, w2, b2,
                                   tile_e=tile_e, compute_dtype=compute_dtype)

    return dict(x=node_attr, edge_attr=edge_attr_new,
                edge_index=edge_index_node, face=cells_node)


# ------------------------------- demo ----------------------------------------
if __name__ == "__main__":
    key = jax.random.PRNGKey(0)
    N, Cc = 16, 8            # num nodes, node feature dim
    num_cells = 6
    corners = 3 * num_cells  # triangle mesh: 3 corner entries per cell
    E = 16                   # cell-graph edges
    Ce = 8                   # edge feature dim
    H, Hout = 32, 16         # MLP hidden / output dims

    ks = jax.random.split(key, 10)
    node_attr = jax.random.normal(ks[0], (N, Cc), jnp.float32)
    edge_attr = jax.random.normal(ks[1], (E, Ce), jnp.float32)
    cells_node = jax.random.randint(ks[2], (corners,), 0, N)
    cells_index = jnp.repeat(jnp.arange(num_cells), 3)
    senders = jax.random.randint(ks[3], (E,), 0, num_cells)
    receivers = jax.random.randint(ks[4], (E,), 0, num_cells)
    receivers = receivers.at[0].set(senders[0])      # ensure a self-edge (mask path)
    cell_edge_index = jnp.stack([senders, receivers])
    edge_index_node = jax.random.randint(ks[5], (2, 24), 0, N)  # pass-through field

    Cin = 2 * Cc + Ce
    w1 = jax.random.normal(ks[6], (Cin, H), jnp.float32) * 0.1
    b1 = jax.random.normal(ks[7], (H,), jnp.float32) * 0.1
    w2 = jax.random.normal(ks[8], (H, Hout), jnp.float32) * 0.1
    b2 = jax.random.normal(ks[9], (Hout,), jnp.float32) * 0.1
    params = (w1, b1, w2, b2)

    # pure-JAX reference (same math, explicit concat)
    cell_attr = jax.ops.segment_sum(node_attr[cells_node], cells_index,
                                    num_segments=num_cells)
    mask = (senders != receivers).astype(jnp.float32)[:, None]
    collected = jnp.concatenate(
        [cell_attr[senders], cell_attr[receivers] * mask, edge_attr], axis=1)
    ref = jnp.maximum(collected @ w1 + b1, 0.0) @ w2 + b2

    # f32 path (exact tolerance)
    out_f32 = edge_block_forward(node_attr, edge_index_node, edge_attr,
                                 cells_node, cells_index, num_cells,
                                 cell_edge_index, params,
                                 compute_dtype=jnp.float32)
    jax.block_until_ready(out_f32["edge_attr"])
    assert np.allclose(np.asarray(out_f32["edge_attr"]), np.asarray(ref),
                       atol=1e-5, rtol=1e-5), "f32 mismatch vs reference"

    # bf16 path (halves HBM bytes on v6e/v7x; loose tolerance)
    out_bf16 = edge_block_forward(node_attr, edge_index_node, edge_attr,
                                  cells_node, cells_index, num_cells,
                                  cell_edge_index, params,
                                  compute_dtype=jnp.bfloat16)
    jax.block_until_ready(out_bf16["edge_attr"])
    assert np.allclose(np.asarray(out_bf16["edge_attr"]), np.asarray(ref),
                       atol=1e-1, rtol=1e-1), "bf16 mismatch vs reference"

    print("KERNEL_OK")
</pallas_src>

<mosaic_0001>
module attributes {stable_mosaic.version = 11 : i64} {
  func.func @_edge_mlp_kernel(%arg0: i32, %arg1: memref<16x128xf32, #tpu.memory_space<vmem>>, %arg2: memref<128x32xf32, #tpu.memory_space<vmem>>, %arg3: memref<1x32xf32, #tpu.memory_space<vmem>>, %arg4: memref<32x128xf32, #tpu.memory_space<vmem>>, %arg5: memref<1x128xf32, #tpu.memory_space<vmem>>, %arg6: memref<16x128xf32, #tpu.memory_space<vmem>>) attributes {dimension_semantics = [#tpu.dimension_semantics<parallel>], iteration_bounds = array<i64: 1>, scalar_prefetch = 0 : i64, scratch_operands = 0 : i64, tpu.core_type = #tpu.core_type<tc>, window_params = [{transform_indices = @transform_0, window_bounds = array<i64: 16, 128>}, {pipeline_mode = #tpu.pipeline_mode<synchronous>, transform_indices = @transform_1, window_bounds = array<i64: 128, 32>}, {pipeline_mode = #tpu.pipeline_mode<synchronous>, transform_indices = @transform_2, window_bounds = array<i64: 1, 32>}, {pipeline_mode = #tpu.pipeline_mode<synchronous>, transform_indices = @transform_3, window_bounds = array<i64: 32, 128>}, {pipeline_mode = #tpu.pipeline_mode<synchronous>, transform_indices = @transform_4, window_bounds = array<i64: 1, 128>}, {transform_indices = @transform_5, window_bounds = array<i64: 16, 128>}]} {
    %c0 = arith.constant 0 : index
    %c0_0 = arith.constant 0 : index
    %0 = vector.load %arg1[%c0, %c0_0] : memref<16x128xf32, #tpu.memory_space<vmem>>, vector<16x128xf32>
    %c0_1 = arith.constant 0 : index
    %c0_2 = arith.constant 0 : index
    %1 = vector.load %arg2[%c0_1, %c0_2] : memref<128x32xf32, #tpu.memory_space<vmem>>, vector<128x32xf32>
    %cst = arith.constant dense<0.000000e+00> : vector<16x32xf32>
    %2 = tpu.matmul %0, %1, %cst {dimension_numbers = #tpu.dot_dimension_numbers<[1], [0], [0], [1], [0, 0, 1, 1], [], []>} : vector<16x128xf32>, vector<128x32xf32>, vector<16x32xf32> -> vector<16x32xf32>
    %c0_3 = arith.constant 0 : index
    %c0_4 = arith.constant 0 : index
    %3 = vector.load %arg3[%c0_3, %c0_4] : memref<1x32xf32, #tpu.memory_space<vmem>>, vector<1x32xf32>
    %4 = vector.broadcast %3 : vector<1x32xf32> to vector<16x32xf32>
    %5 = arith.addf %2, %4 : vector<16x32xf32>
    %cst_5 = arith.constant 0.000000e+00 : f32
    %6 = vector.broadcast %cst_5 : f32 to vector<16x32xf32>
    %7 = arith.maximumf %5, %6 : vector<16x32xf32>
    %c0_6 = arith.constant 0 : index
    %c0_7 = arith.constant 0 : index
    %8 = vector.load %arg4[%c0_6, %c0_7] : memref<32x128xf32, #tpu.memory_space<vmem>>, vector<32x128xf32>
    %cst_8 = arith.constant dense<0.000000e+00> : vector<16x128xf32>
    %9 = tpu.matmul %7, %8, %cst_8 {dimension_numbers = #tpu.dot_dimension_numbers<[1], [0], [0], [1], [0, 0, 1, 1], [], []>} : vector<16x32xf32>, vector<32x128xf32>, vector<16x128xf32> -> vector<16x128xf32>
    %c0_9 = arith.constant 0 : index
    %c0_10 = arith.constant 0 : index
    %10 = vector.load %arg5[%c0_9, %c0_10] : memref<1x128xf32, #tpu.memory_space<vmem>>, vector<1x128xf32>
    %11 = vector.broadcast %10 : vector<1x128xf32> to vector<16x128xf32>
    %12 = arith.addf %9, %11 : vector<16x128xf32>
    %c0_11 = arith.constant 0 : index
    %c0_12 = arith.constant 0 : index
    %13 = vector.load %arg6[%c0_11, %c0_12] : memref<16x128xf32, #tpu.memory_space<vmem>>, vector<16x128xf32>
    tpu.vector_store %arg6[%c0_11, %c0_12], %12 {strides = array<i32>} : memref<16x128xf32, #tpu.memory_space<vmem>>, vector<16x128xf32>,
    return
  }
  func.func @transform_0(%arg0: i32) -> (i32, i32) {
    %c0_i32 = arith.constant 0 : i32
    %c0_i32_0 = arith.constant 0 : i32
    return %arg0, %c0_i32 : i32, i32
  }
  func.func @transform_1(%arg0: i32) -> (i32, i32) {
    %c0_i32 = arith.constant 0 : i32
    %c0_i32_0 = arith.constant 0 : i32
    %c0_i32_1 = arith.constant 0 : i32
    return %c0_i32, %c0_i32_0 : i32, i32
  }
  func.func @transform_2(%arg0: i32) -> (i32, i32) {
    %c0_i32 = arith.constant 0 : i32
    %c0_i32_0 = arith.constant 0 : i32
    %c0_i32_1 = arith.constant 0 : i32
    return %c0_i32, %c0_i32_0 : i32, i32
  }
  func.func @transform_3(%arg0: i32) -> (i32, i32) {
    %c0_i32 = arith.constant 0 : i32
    %c0_i32_0 = arith.constant 0 : i32
    %c0_i32_1 = arith.constant 0 : i32
    return %c0_i32, %c0_i32_0 : i32, i32
  }
  func.func @transform_4(%arg0: i32) -> (i32, i32) {
    %c0_i32 = arith.constant 0 : i32
    %c0_i32_0 = arith.constant 0 : i32
    %c0_i32_1 = arith.constant 0 : i32
    return %c0_i32, %c0_i32_0 : i32, i32
  }
  func.func @transform_5(%arg0: i32) -> (i32, i32) {
    %c0_i32 = arith.constant 0 : i32
    %c0_i32_0 = arith.constant 0 : i32
    return %arg0, %c0_i32 : i32, i32
  }
}

</mosaic_0001>

<llo_original>
// kernel: tpu_custom_call.1
$region0: #{tpu_custom_call.1}
  #allocation0 [shape = 'u32[]', space=smem, size = 0x4, offset = 0x4, fixed_abs, tag = 'smem constant byte address 0x4 - core index']
  #allocation1 [shape = 'u32[144,128]{1,0:T(1,128)}', space=vmem, size = 0x12000, scoped, tag = 'internal scratch']
  %s0 = inlined_call_operand.vmem [shape: f32[16,128], index: 0, kind: input, shape index: {}]
  %s1 = inlined_call_operand.vmem [shape: f32[128,32], index: 1, kind: input, shape index: {}]
  %s2 = inlined_call_operand.vmem [shape: f32[1,32], index: 2, kind: input, shape index: {}]
  %s3 = inlined_call_operand.vmem [shape: f32[32,128], index: 3, kind: input, shape index: {}]
  %s4 = inlined_call_operand.vmem [shape: f32[1,128], index: 4, kind: input, shape index: {}]
  %s5 = inlined_call_operand.hbm [shape: f32[16,128], index: 5, kind: output, shape index: {}]
  %s6 = sld [smem:[#allocation0]]
  $region30: #{tpu_custom_call.1} parent=0
    _
  %s8 = ssub.s32 1, %s6
  %s9 = scalar_select 0, %s8, %s6
  $region1: #{tpu_custom_call.1} parent=0
    #allocation2 [shape = 'u8[8192]{0}', space=vmem, size = 0x2000, scoped, tag = 'output window, operand 0, single buffered']
    #allocation3 [shape = 's32[1]{0}', space=sflag, size = 0x4, scoped, tag = 'scoped memory for tpu_custom_call.1']
    %10 = vsyncpa [#allocation3], 0
    // Predicated region
    $region2: #{tpu_custom_call.1} parent=1 // pred_check
      _
    $region3: #{tpu_custom_call.1} parent=1 // pred_check_branch
      %12 = sbr.rel (0) target = $region5
    $region4: #{tpu_custom_call.1} parent=1 // pred_region
      _
    $region5: #{tpu_custom_call.1} parent=1 // pred_fallthru
      _
    // Predicated region
    $region6: #{tpu_custom_call.1} parent=1 // pred_check
      _
    $region7: #{tpu_custom_call.1} parent=1 // pred_check_branch
      %14 = sbr.rel (0) target = $region9
    $region8: #{tpu_custom_call.1} parent=1 // pred_region
      _
    $region9: #{tpu_custom_call.1} parent=1 // pred_fallthru
      _
    // Predicated region
    $region10: #{tpu_custom_call.1} parent=1 // pred_check
      _
    $region11: #{tpu_custom_call.1} parent=1 // pred_check_branch
      %16 = sbr.rel (0) target = $region13
    $region12: #{tpu_custom_call.1} parent=1 // pred_region
      _
    $region13: #{tpu_custom_call.1} parent=1 // pred_fallthru
      _
    // Predicated region
    $region14: #{tpu_custom_call.1} parent=1 // pred_check
      _
    $region15: #{tpu_custom_call.1} parent=1 // pred_check_branch
      %18 = sbr.rel (0) target = $region17
    $region16: #{tpu_custom_call.1} parent=1 // pred_region
      _
    $region17: #{tpu_custom_call.1} parent=1 // pred_fallthru
      _
    // Predicated region
    $region18: #{tpu_custom_call.1} parent=1 // pred_check
      _
    $region19: #{tpu_custom_call.1} parent=1 // pred_check_branch
      %20 = sbr.rel (0) target = $region21
    $region20: #{tpu_custom_call.1} parent=1 // pred_region
      _
    $region21: #{tpu_custom_call.1} parent=1 // pred_fallthru
      _
    %v21 = vld [vmem:[%s0] sm:$0xff]
    %v22 = vld [vmem:[%s0 + $0x8] sm:$0xff]
    %v23 = vld [vmem:[%s1] sm:$0xff]
    %v24 = vld [vmem:[%s1 + $0x8] sm:$0xff]
    %v25 = vld [vmem:[%s1 + $0x10] sm:$0xff]
    %v26 = vld [vmem:[%s1 + $0x18] sm:$0xff]
    %v27 = vld [vmem:[%s1 + $0x20] sm:$0xff]
    %v28 = vld [vmem:[%s1 + $0x28] sm:$0xff]
    %v29 = vld [vmem:[%s1 + $0x30] sm:$0xff]
    %v30 = vld [vmem:[%s1 + $0x38] sm:$0xff]
    %v31 = vld [vmem:[%s1 + $0x40] sm:$0xff]
    %v32 = vld [vmem:[%s1 + $0x48] sm:$0xff]
    %v33 = vld [vmem:[%s1 + $0x50] sm:$0xff]
    %v34 = vld [vmem:[%s1 + $0x58] sm:$0xff]
    %v35 = vld [vmem:[%s1 + $0x60] sm:$0xff]
    %v36 = vld [vmem:[%s1 + $0x68] sm:$0xff]
    %v37 = vld [vmem:[%s1 + $0x70] sm:$0xff]
    %v38 = vld [vmem:[%s1 + $0x78] sm:$0xff]
    %v39 = vld [vmem:[%s2] sm:$0x1]
    %v41 = vlaneseq
    %v42 = vshrl.u32 %v41, 7
    %v43 = vsub.s32 0, %v42
    %v44 = vrot.slane %v39, %v43
    %46 = vmatprep.subr.mxu0 0.0
    %47 = vmatpush1.msra.mxu0 %v23
    %48 = vmatprep.subr.mxu0 0.0
    %49 = vmatpush1.msra.mxu0 %v24
    %50 = vmatprep.subr.mxu0 0.0
    %51 = vmatpush1.msra.mxu0 %v25
    %52 = vmatprep.subr.mxu0 0.0
    %53 = vmatpush1.msra.mxu0 %v26
    %54 = vmatprep.subr.mxu0 0.0
    %55 = vmatpush1.msra.mxu0 %v27
    %56 = vmatprep.subr.mxu0 0.0
    %57 = vmatpush1.msra.mxu0 %v28
    %58 = vmatprep.subr.mxu0 0.0
    %59 = vmatpush1.msra.mxu0 %v29
    %60 = vmatprep.subr.mxu0 0.0
    %61 = vmatpush1.msra.mxu0 %v30
    %62 = vmatprep.subr.mxu0 0.0
    %63 = vmatpush1.msra.mxu0 %v31
    %64 = vmatprep.subr.mxu0 0.0
    %65 = vmatpush1.msra.mxu0 %v32
    %66 = vmatprep.subr.mxu0 0.0
    %67 = vmatpush1.msra.mxu0 %v33
    %68 = vmatprep.subr.mxu0 0.0
    %69 = vmatpush1.msra.mxu0 %v34
    %70 = vmatprep.subr.mxu0 0.0
    %71 = vmatpush1.msra.mxu0 %v35
    %72 = vmatprep.subr.mxu0 0.0
    %73 = vmatpush1.msra.mxu0 %v36
    %74 = vmatprep.subr.mxu0 0.0
    %75 = vmatpush1.msra.mxu0 %v37
    %76 = vmatprep.subr.mxu0 0.0
    %77 = vmatpush1.msra.mxu0 %v38
    %78 = vmatprep.subr.mxu0 0.0
    %79 = vmatpush1.msra.mxu0 0.0
    %80 = vmatprep.subr.mxu0 0.0
    %81 = vmatpush1.msra.mxu0 0.0
    %82 = vmatprep.subr.mxu0 0.0
    %83 = vmatpush1.msra.mxu0 0.0
    %84 = vmatprep.subr.mxu0 0.0
    %85 = vmatpush1.msra.mxu0 0.0
    %86 = vmatprep.subr.mxu0 0.0
    %87 = vmatpush1.msra.mxu0 0.0
    %88 = vmatprep.subr.mxu0 0.0
    %89 = vmatpush1.msra.mxu0 0.0
    %90 = vmatprep.subr.mxu0 0.0
    %91 = vmatpush1.msra.mxu0 0.0
    %92 = vmatprep.subr.mxu0 0.0
    %93 = vmatpush1.msra.mxu0 0.0
    %94 = vmatprep.subr.mxu0 0.0
    %95 = vmatpush1.msra.mxu0 0.0
    %96 = vmatprep.subr.mxu0 0.0
    %97 = vmatpush1.msra.mxu0 0.0
    %98 = vmatprep.subr.mxu0 0.0
    %99 = vmatpush1.msra.mxu0 0.0
    %100 = vmatprep.subr.mxu0 0.0
    %101 = vmatpush1.msra.mxu0 0.0
    %102 = vmatprep.subr.mxu0 0.0
    %103 = vmatpush1.msra.mxu0 0.0
    %104 = vmatprep.subr.mxu0 0.0
    %105 = vmatpush1.msra.mxu0 0.0
    %106 = vmatprep.subr.mxu0 0.0
    %107 = vmatpush1.msra.mxu0 0.0
    %108 = vmatprep.subr.mxu0 0.0
    %109 = vmatpush1.msra.mxu0 0.0
    %110 = vmatprep.mubr.f32.mxu0 0.0
    %111 = vmatmul.mubr.f32.gmra.mrb[0].mxu0 %v21
    %v112 = vpop.f32.mrb[0].mxu0
    %v113 = vadd.f32 %v44, %v112
    %v114 = vpop.f32.mrb[0].mxu0
    %115 = vmatprep.mubr.f32.mxu0 0.0
    %116 = vmatmul.mubr.f32.gmra.mrb[0].mxu0 %v22
    %v117 = vpop.f32.mrb[0].mxu0
    %v118 = vadd.f32 %v44, %v117
    %v119 = vpop.f32.mrb[0].mxu0
    %120 = vdwg.mxu0
    %v121 = vmax.f32 %v113, 0.0
    %v122 = vmax.f32 %v118, 0.0
    %v123 = vld [vmem:[%s3] sm:$0xff]
    %v124 = vld [vmem:[%s3 + $0x8] sm:$0xff]
    %v125 = vld [vmem:[%s3 + $0x10] sm:$0xff]
    %v126 = vld [vmem:[%s3 + $0x18] sm:$0xff]
    %v127 = vld [vmem:[%s4] sm:$0x1]
    %v129 = vlaneseq
    %v130 = vshrl.u32 %v129, 7
    %v131 = vsub.s32 0, %v130
    %v132 = vrot.slane %v127, %v131
    %vm134 = vcmask 261120
    %v136 = vsel %vm134, %v121, 0
    %v139 = vsel %vm134, %v122, 0
    %141 = vmatprep.subr.mxu0 0.0
    %142 = vmatpush1.msra.mxu0 %v123
    %143 = vmatprep.subr.mxu0 0.0
    %144 = vmatpush1.msra.mxu0 %v124
    %145 = vmatprep.subr.mxu0 0.0
    %146 = vmatpush1.msra.mxu0 %v125
    %147 = vmatprep.subr.mxu0 0.0
    %148 = vmatpush1.msra.mxu0 %v126
    %149 = vmatprep.subr.mxu0 0.0
    %150 = vmatpush1.msra.mxu0 0.0
    %151 = vmatprep.subr.mxu0 0.0
    %152 = vmatpush1.msra.mxu0 0.0
    %153 = vmatprep.subr.mxu0 0.0
    %154 = vmatpush1.msra.mxu0 0.0
    %155 = vmatprep.subr.mxu0 0.0
    %156 = vmatpush1.msra.mxu0 0.0
    %157 = vmatprep.subr.mxu0 0.0
    %158 = vmatpush1.msra.mxu0 0.0
    %159 = vmatprep.subr.mxu0 0.0
    %160 = vmatpush1.msra.mxu0 0.0
    %161 = vmatprep.subr.mxu0 0.0
    %162 = vmatpush1.msra.mxu0 0.0
    %163 = vmatprep.subr.mxu0 0.0
    %164 = vmatpush1.msra.mxu0 0.0
    %165 = vmatprep.subr.mxu0 0.0
    %166 = vmatpush1.msra.mxu0 0.0
    %167 = vmatprep.subr.mxu0 0.0
    %168 = vmatpush1.msra.mxu0 0.0
    %169 = vmatprep.subr.mxu0 0.0
    %170 = vmatpush1.msra.mxu0 0.0
    %171 = vmatprep.subr.mxu0 0.0
    %172 = vmatpush1.msra.mxu0 0.0
    %173 = vmatprep.subr.mxu0 0.0
    %174 = vmatpush1.msra.mxu0 0.0
    %175 = vmatprep.subr.mxu0 0.0
    %176 = vmatpush1.msra.mxu0 0.0
    %177 = vmatprep.subr.mxu0 0.0
    %178 = vmatpush1.msra.mxu0 0.0
    %179 = vmatprep.subr.mxu0 0.0
    %180 = vmatpush1.msra.mxu0 0.0
    %181 = vmatprep.subr.mxu0 0.0
    %182 = vmatpush1.msra.mxu0 0.0
    %183 = vmatprep.subr.mxu0 0.0
    %184 = vmatpush1.msra.mxu0 0.0
    %185 = vmatprep.subr.mxu0 0.0
    %186 = vmatpush1.msra.mxu0 0.0
    %187 = vmatprep.subr.mxu0 0.0
    %188 = vmatpush1.msra.mxu0 0.0
    %189 = vmatprep.subr.mxu0 0.0
    %190 = vmatpush1.msra.mxu0 0.0
    %191 = vmatprep.subr.mxu0 0.0
    %192 = vmatpush1.msra.mxu0 0.0
    %193 = vmatprep.subr.mxu0 0.0
    %194 = vmatpush1.msra.mxu0 0.0
    %195 = vmatprep.subr.mxu0 0.0
    %196 = vmatpush1.msra.mxu0 0.0
    %197 = vmatprep.subr.mxu0 0.0
    %198 = vmatpush1.msra.mxu0 0.0
    %199 = vmatprep.subr.mxu0 0.0
    %200 = vmatpush1.msra.mxu0 0.0
    %201 = vmatprep.subr.mxu0 0.0
    %202 = vmatpush1.msra.mxu0 0.0
    %203 = vmatprep.subr.mxu0 0.0
    %204 = vmatpush1.msra.mxu0 0.0
    %205 = vmatprep.mubr.f32.mxu0 0.0
    %206 = vmatmul.mubr.f32.gmra.mrb[0].mxu0 %v136
    %v207 = vpop.f32.mrb[0].mxu0
    %v208 = vadd.f32 %v132, %v207
    %v209 = vpop.f32.mrb[0].mxu0
    %210 = vmatprep.mubr.f32.mxu0 0.0
    %211 = vmatmul.mubr.f32.gmra.mrb[0].mxu0 %v139
    %v212 = vpop.f32.mrb[0].mxu0
    %v213 = vadd.f32 %v132, %v212
    %v214 = vpop.f32.mrb[0].mxu0
    %215 = vdwg.mxu0
    %216 = vst [vmem:[#allocation2] sm:$0xff] %v208
    %217 = vst [vmem:[#allocation2 + $0x8] sm:$0xff] %v213
    // Predicated region
    $region22: #{tpu_custom_call.1} parent=1 // pred_check
      _
    $region23: #{tpu_custom_call.1} parent=1 // pred_check_branch
      %219 = sbr.rel (0) target = $region25
    $region24: #{tpu_custom_call.1} parent=1 // pred_region
      %s221 = ssub.s32 256, 256
      %222 = vsyncadd [#allocation3], %s221
      %s223 = sshll.u32 [#allocation2], 4
      %s224 = int_to_ptr.vmem [resolvable:$true] %s223
      %229 = dma.vmem_to_hbm [thread:$0]  %s224, 256, %s5, [#allocation3], 128, 128, 8
    $region25: #{tpu_custom_call.1} parent=1 // pred_fallthru
      _
    // Predicated region
    $region26: #{tpu_custom_call.1} parent=1 // pred_check
      _
    $region27: #{tpu_custom_call.1} parent=1 // pred_check_branch
      %231 = sbr.rel (0) target = $region29
    $region28: #{tpu_custom_call.1} parent=1 // pred_region
      %232 = dma.done [#allocation3], 256
    $region29: #{tpu_custom_call.1} parent=1 // pred_fallthru
      _
    %233 = vsyncpa [#allocation3], 1

</llo_original>
